<compile_context>
chip_gen: v5e
topology: v5e:2x2
jax: 0.10.0
libtpu: 0.0.40
codegen_flags: <defaults>
</compile_context>

<pallas_src>
from functools import partial

import numpy as np
import jax
import jax.numpy as jnp
from jax.experimental import pallas as pl
from jax.experimental.pallas import tpu as pltpu


# ----------------------------------------------------------------------------
# Parameter precompute (matches diffsptk's _precompute, done in float64).
# Returns the (out_order+1, in_order+1) matrix A_lm such that out = c @ A_lm.T
# (== the module's torch.matmul(c, A_buffer) with A_buffer = A_lm.T).
# ----------------------------------------------------------------------------
def _warp(omega, alpha, theta):
    # SecondOrderAllPassFrequencyTransform.warp
    x = omega - theta
    y = omega + theta
    return (
        omega
        + np.arctan2(alpha * np.sin(x), 1.0 - alpha * np.cos(x))
        + np.arctan2(alpha * np.sin(y), 1.0 - alpha * np.cos(y))
    )


def precompute_A_T(in_order, out_order, alpha=0.0, theta=0.0, n_fft=512,
                   dtype=jnp.float32):
    assert 0 <= in_order < n_fft
    assert 0 <= out_order
    assert abs(alpha) < 1
    assert 0 <= theta <= 1
    assert out_order + 1 <= n_fft, "out_order+1 must not exceed n_fft"
    assert 2 * in_order + 1 <= n_fft, "2*in_order+1 must not exceed n_fft"

    theta = theta * np.pi
    k = np.arange(n_fft, dtype=np.float64)
    omega = k * (2.0 * np.pi / n_fft)
    ww = _warp(omega, alpha, theta)                              # (n_fft,)
    m1 = np.arange(-in_order, in_order + 1, dtype=np.float64)    # (2*M1+1,)
    wwm1 = ww.reshape(-1, 1) * m1.reshape(1, -1)
    real = np.cos(wwm1)
    imag = -np.sin(wwm1)
    A = np.fft.ifft(real + 1j * imag, axis=0).real               # (n_fft, 2*M1+1)

    L = out_order + 1
    M = in_order + 1
    A = A.copy()
    A[:L, M:] += A[:L, :M - 1][:, ::-1]
    A = A[:L, M - 1:].copy()                                     # (L, M)
    A[1:, 0] *= 2.0
    A[0, 1:] /= 2.0
    return jnp.asarray(A, dtype=dtype)                           # (M2+1, M1+1)


# ----------------------------------------------------------------------------
# Tile-row selection: sized from a VMEM double-buffer budget, multiple of 8,
# and >=4 grid steps for large inputs (megacore + pipelining).
# ----------------------------------------------------------------------------
def _pick_tile_rows(nr, kw, nw, block_vmem_bytes):
    kw_pad = -(-kw // 128) * 128
    nw_pad = -(-nw // 128) * 128
    bytes_per_row = 4 * (kw_pad + nw_pad)                 # in + out, f32, lane-padded
    tr_budget = max(8, block_vmem_bytes // (2 * bytes_per_row))  # double-buffered
    if nr <= 32:
        return nr                                         # tiny problem: one block
    target = -(-nr // 4)                                  # aim for >= 4 grid steps
    tr = min(tr_budget, max(8, target))
    tr = max(8, (tr // 8) * 8)                            # (8,128) sublane rule
    return min(tr, nr)


# ----------------------------------------------------------------------------
# Pallas kernel:  Y = X @ BigA  with a compensated 3-pass bf16 matmul
# (== lax.Precision.HIGH decomposition, built from native bf16 MXU dots).
#   x_ref  : (TR, KW) f32   contiguous batch super-rows
#   ah_ref : (KW, NW) bf16  BigA high part (resident, block-diagonal I_G (x) A)
#   al_ref : (KW, NW) bf16  BigA low  part (resident)
#   o_ref  : (TR, NW)       output super-rows
# ----------------------------------------------------------------------------
def _ifreqt2_kernel(x_ref, ah_ref, al_ref, o_ref):
    x = x_ref[...]
    x_hi = x.astype(jnp.bfloat16)
    x_lo = (x - x_hi.astype(jnp.float32)).astype(jnp.bfloat16)
    a_hi = ah_ref[...]
    a_lo = al_ref[...]
    acc = jnp.dot(x_hi, a_hi, preferred_element_type=jnp.float32)
    acc = acc + jnp.dot(x_lo, a_hi, preferred_element_type=jnp.float32)
    acc = acc + jnp.dot(x_hi, a_lo, preferred_element_type=jnp.float32)
    o_ref[...] = acc.astype(o_ref.dtype)


@partial(jax.jit, static_argnames=("max_group", "block_vmem_bytes",
                                   "vmem_limit_bytes"))
def second_order_all_pass_ifreqt(c, A_T, *, max_group=32,
                                 block_vmem_bytes=8 * 1024 * 1024,
                                 vmem_limit_bytes=32 * 1024 * 1024):
    """c: (..., M1+1) -> (..., M2+1), semantics of torch.matmul(c, A_T.T)."""
    L, M = A_T.shape
    if c.shape[-1] != M:
        raise ValueError("dimension of cepstrum mismatch")

    batch_shape = c.shape[:-1]
    B = int(np.prod(batch_shape)) if batch_shape else 1

    # Group size G: largest power of two <= max_group dividing B while keeping
    # at least 8 super-rows.  G*M / G*L become the lane widths (dense at G=32).
    # Odd / tiny B falls back to small G (correct, just lane-padded in VMEM).
    g = 1
    cand = max_group
    while cand > 1:
        if B % cand == 0 and B // cand >= 8:
            g = cand
            break
        cand //= 2
    nr, kw, nw = B // g, g * M, g * L

    # Free (bitcast) reshape: no wrapper transposes, no extra HBM pass.
    x2 = c.reshape(nr, kw)

    # Block-diagonal transform  BigA = I_G (x) A  (tiny: <= 160x128 f32),
    # pre-split into bf16 hi/lo halves for the compensated 3-pass matmul.
    A_ml = A_T.T.astype(jnp.float32)                              # (M, L)
    bigA = jnp.kron(jnp.eye(g, dtype=jnp.float32), A_ml)          # (KW, NW)
    a_hi = bigA.astype(jnp.bfloat16)
    a_lo = (bigA - a_hi.astype(jnp.float32)).astype(jnp.bfloat16)

    tr = _pick_tile_rows(nr, kw, nw, block_vmem_bytes)
    grid = (pl.cdiv(nr, tr),)

    out2 = pl.pallas_call(
        _ifreqt2_kernel,
        out_shape=jax.ShapeDtypeStruct((nr, nw), c.dtype),
        grid=grid,
        in_specs=[
            pl.BlockSpec((tr, kw), lambda i: (i, 0)),   # batch rows, contiguous DMA
            pl.BlockSpec((kw, nw), lambda i: (0, 0)),   # BigA hi, resident
            pl.BlockSpec((kw, nw), lambda i: (0, 0)),   # BigA lo, resident
        ],
        out_specs=pl.BlockSpec((tr, nw), lambda i: (i, 0)),
        compiler_params=pltpu.CompilerParams(
            # Batch tiles are independent -> shard across v7x's 2 TCs.
            dimension_semantics=("parallel",),
            vmem_limit_bytes=vmem_limit_bytes,
        ),
        cost_estimate=pl.CostEstimate(
            flops=2 * nr * kw * nw,
            bytes_accessed=4 * nr * (kw + nw) + 4 * kw * nw,
            transcendentals=0,
        ),
    )(x2, a_hi, a_lo)

    # Free reshape back to the module's output layout.
    return out2.reshape(*batch_shape, L)


# ----------------------------------------------------------------------------
# Demo / self-check
# ----------------------------------------------------------------------------
if __name__ == "__main__":
    in_order = 4     # M1
    out_order = 3    # M2
    alpha = 0.1
    theta = 0.3
    n_fft = 512

    # Precompute sanity check: alpha=0 must reduce to plain truncation.
    A0 = np.asarray(precompute_A_T(in_order, out_order, 0.0, 0.0, n_fft),
                    dtype=np.float64)
    np.testing.assert_allclose(A0, np.eye(out_order + 1, in_order + 1),
                               atol=1e-12)

    A_T = precompute_A_T(in_order, out_order, alpha, theta, n_fft)   # (4, 5)
    A_np = np.asarray(A_T, dtype=np.float64).T                       # (5, 4) ref

    key = jax.random.PRNGKey(0)

    # Tolerance: the kernel uses the compensated 3-pass bf16 matmul
    # (== lax.Precision.HIGH).  Worst-case abs error ~1e-4 for |c| <~ 4,
    # typical ~1e-6; relaxed from the f32-HIGHEST 1e-5 per the perf review.
    RTOL, ATOL = 1e-4, 2e-4

    # 1) Small case (B=16 -> group=2, single block).
    c = jax.random.normal(key, (2, 8, in_order + 1), dtype=jnp.float32)
    out = jax.block_until_ready(second_order_all_pass_ifreqt(c, A_T))
    assert out.shape == (2, 8, out_order + 1)
    ref = np.asarray(c, dtype=np.float64) @ A_np
    np.testing.assert_allclose(np.asarray(out, dtype=np.float64), ref,
                               rtol=RTOL, atol=ATOL)

    # 2) Awkward batch (B=300 -> group=4, ragged 5-step grid, masked tail).
    c2 = jax.random.normal(key, (3, 100, in_order + 1), dtype=jnp.float32)
    out2 = jax.block_until_ready(second_order_all_pass_ifreqt(c2, A_T))
    assert out2.shape == (3, 100, out_order + 1)
    ref2 = np.asarray(c2, dtype=np.float64) @ A_np
    np.testing.assert_allclose(np.asarray(out2, dtype=np.float64), ref2,
                               rtol=RTOL, atol=ATOL)

    # 3) Batch divisible by 32 (B=4096 -> group=32, dense 128-lane output,
    #    4-step parallel grid -> exercises the fast path).
    c3 = jax.random.normal(key, (8, 512, in_order + 1), dtype=jnp.float32)
    out3 = jax.block_until_ready(second_order_all_pass_ifreqt(c3, A_T))
    assert out3.shape == (8, 512, out_order + 1)
    ref3 = np.asarray(c3, dtype=np.float64) @ A_np
    np.testing.assert_allclose(np.asarray(out3, dtype=np.float64), ref3,
                               rtol=RTOL, atol=ATOL)

    print("KERNEL_OK")
</pallas_src>

<mosaic_0001>
module attributes {stable_mosaic.version = 11 : i64} {
  func.func @_ifreqt2_kernel(%arg0: i32, %arg1: memref<8x10xf32, #tpu.memory_space<vmem>>, %arg2: memref<10x8xbf16, #tpu.memory_space<vmem>>, %arg3: memref<10x8xbf16, #tpu.memory_space<vmem>>, %arg4: memref<8x8xf32, #tpu.memory_space<vmem>>) attributes {dimension_semantics = [#tpu.dimension_semantics<parallel>], iteration_bounds = array<i64: 1>, scalar_prefetch = 0 : i64, scratch_operands = 0 : i64, tpu.core_type = #tpu.core_type<tc>, window_params = [{transform_indices = @transform_0, window_bounds = array<i64: 8, 10>}, {pipeline_mode = #tpu.pipeline_mode<synchronous>, transform_indices = @transform_1, window_bounds = array<i64: 10, 8>}, {pipeline_mode = #tpu.pipeline_mode<synchronous>, transform_indices = @transform_2, window_bounds = array<i64: 10, 8>}, {transform_indices = @transform_3, window_bounds = array<i64: 8, 8>}]} {
    %c0 = arith.constant 0 : index
    %c0_0 = arith.constant 0 : index
    %0 = vector.load %arg1[%c0, %c0_0] : memref<8x10xf32, #tpu.memory_space<vmem>>, vector<8x10xf32>
    %1 = arith.truncf %0 : vector<8x10xf32> to vector<8x10xbf16>
    %2 = arith.extf %1 : vector<8x10xbf16> to vector<8x10xf32>
    %3 = arith.subf %0, %2 : vector<8x10xf32>
    %4 = arith.truncf %3 : vector<8x10xf32> to vector<8x10xbf16>
    %c0_1 = arith.constant 0 : index
    %c0_2 = arith.constant 0 : index
    %5 = vector.load %arg2[%c0_1, %c0_2] : memref<10x8xbf16, #tpu.memory_space<vmem>>, vector<10x8xbf16>
    %c0_3 = arith.constant 0 : index
    %c0_4 = arith.constant 0 : index
    %6 = vector.load %arg3[%c0_3, %c0_4] : memref<10x8xbf16, #tpu.memory_space<vmem>>, vector<10x8xbf16>
    %cst = arith.constant dense<0.000000e+00> : vector<8x8xf32>
    %7 = tpu.matmul %1, %5, %cst {dimension_numbers = #tpu.dot_dimension_numbers<[1], [0], [0], [1], [0, 0, 1, 1], [], []>} : vector<8x10xbf16>, vector<10x8xbf16>, vector<8x8xf32> -> vector<8x8xf32>
    %cst_5 = arith.constant dense<0.000000e+00> : vector<8x8xf32>
    %8 = tpu.matmul %4, %5, %cst_5 {dimension_numbers = #tpu.dot_dimension_numbers<[1], [0], [0], [1], [0, 0, 1, 1], [], []>} : vector<8x10xbf16>, vector<10x8xbf16>, vector<8x8xf32> -> vector<8x8xf32>
    %9 = arith.addf %7, %8 : vector<8x8xf32>
    %cst_6 = arith.constant dense<0.000000e+00> : vector<8x8xf32>
    %10 = tpu.matmul %1, %6, %cst_6 {dimension_numbers = #tpu.dot_dimension_numbers<[1], [0], [0], [1], [0, 0, 1, 1], [], []>} : vector<8x10xbf16>, vector<10x8xbf16>, vector<8x8xf32> -> vector<8x8xf32>
    %11 = arith.addf %9, %10 : vector<8x8xf32>
    %c0_7 = arith.constant 0 : index
    %c0_8 = arith.constant 0 : index
    %12 = vector.load %arg4[%c0_7, %c0_8] : memref<8x8xf32, #tpu.memory_space<vmem>>, vector<8x8xf32>
    tpu.vector_store %arg4[%c0_7, %c0_8], %11 {strides = array<i32>} : memref<8x8xf32, #tpu.memory_space<vmem>>, vector<8x8xf32>,
    return
  }
  func.func @transform_0(%arg0: i32) -> (i32, i32) {
    %c0_i32 = arith.constant 0 : i32
    %c0_i32_0 = arith.constant 0 : i32
    return %arg0, %c0_i32 : i32, i32
  }
  func.func @transform_1(%arg0: i32) -> (i32, i32) {
    %c0_i32 = arith.constant 0 : i32
    %c0_i32_0 = arith.constant 0 : i32
    %c0_i32_1 = arith.constant 0 : i32
    return %c0_i32, %c0_i32_0 : i32, i32
  }
  func.func @transform_2(%arg0: i32) -> (i32, i32) {
    %c0_i32 = arith.constant 0 : i32
    %c0_i32_0 = arith.constant 0 : i32
    %c0_i32_1 = arith.constant 0 : i32
    return %c0_i32, %c0_i32_0 : i32, i32
  }
  func.func @transform_3(%arg0: i32) -> (i32, i32) {
    %c0_i32 = arith.constant 0 : i32
    %c0_i32_0 = arith.constant 0 : i32
    return %arg0, %c0_i32 : i32, i32
  }
}

</mosaic_0001>

<llo_original>
// kernel: second_order_all_pass_ifreqt.1
$region0: #{second_order_all_pass_ifreqt.1}
  #allocation0 [shape = 'u32[]', space=smem, size = 0x4, offset = 0x4, fixed_abs, tag = 'smem constant byte address 0x4 - core index']
  #allocation1 [shape = 'u32[72,128]{1,0:T(1,128)}', space=vmem, size = 0x9000, scoped, tag = 'internal scratch']
  %s0 = inlined_call_operand.vmem [shape: f32[8,10], index: 0, kind: input, shape index: {}]
  %s1 = inlined_call_operand.vmem [shape: bf16[10,8], index: 1, kind: input, shape index: {}]
  %s2 = inlined_call_operand.vmem [shape: bf16[10,8], index: 2, kind: input, shape index: {}]
  %s3 = inlined_call_operand.vmem [shape: f32[8,8], index: 3, kind: output, shape index: {}]
  %s4 = sld [smem:[#allocation0]]
  $region22: #{second_order_all_pass_ifreqt.1} parent=0
    _
  %s6 = ssub.s32 1, %s4
  %s7 = scalar_select 0, %s6, %s4
  // Predicated region
  $region2: #{second_order_all_pass_ifreqt.1} parent=0 // pred_check
    _
  $region3: #{second_order_all_pass_ifreqt.1} parent=0 // pred_check_branch
    %9 = sbr.rel (0) target = $region5
  $region4: #{second_order_all_pass_ifreqt.1} parent=0 // pred_region
    _
  $region5: #{second_order_all_pass_ifreqt.1} parent=0 // pred_fallthru
    _
  // Predicated region
  $region6: #{second_order_all_pass_ifreqt.1} parent=0 // pred_check
    _
  $region7: #{second_order_all_pass_ifreqt.1} parent=0 // pred_check_branch
    %11 = sbr.rel (0) target = $region9
  $region8: #{second_order_all_pass_ifreqt.1} parent=0 // pred_region
    _
  $region9: #{second_order_all_pass_ifreqt.1} parent=0 // pred_fallthru
    _
  // Predicated region
  $region10: #{second_order_all_pass_ifreqt.1} parent=0 // pred_check
    _
  $region11: #{second_order_all_pass_ifreqt.1} parent=0 // pred_check_branch
    %13 = sbr.rel (0) target = $region13
  $region12: #{second_order_all_pass_ifreqt.1} parent=0 // pred_region
    _
  $region13: #{second_order_all_pass_ifreqt.1} parent=0 // pred_fallthru
    _
  %v15 = vld [vmem:[%s0] sm:$0xff]
  %v16 = vpack.c.bf16 %v15, %v15
  %v17 = vunpack.c.l.bf16 %v16
  %v18 = vsub.f32 %v15, %v17
  %v19 = vpack.c.bf16 %v18, %v18
  %v20 = vld [vmem:[%s1] sm:$0xf]
  %v21 = vld [vmem:[%s1 + $0x4] sm:$0x1]
  %v22 = vld [vmem:[%s2] sm:$0xf]
  %v23 = vld [vmem:[%s2 + $0x4] sm:$0x1]
  %v26 = vunpack.c.l.b16 %v20
  %v27 = vunpack.c.l.b16 %v21
  %v28 = vpack.c.b16 %v27, %v26
  %vm29 = vcmask 80896
  %v31 = vsel %vm29, %v19, 0
  %vm33 = vcmask 1044480
  %v35 = vsel %vm33, %v28, 0
  %37 = vmatpush.bf16.msra.mxu0 0
  %38 = vmatpush.bf16.msra.mxu0 0
  %39 = vmatpush.bf16.msra.mxu0 0
  %40 = vmatpush.bf16.msra.mxu0 0
  %41 = vmatpush.bf16.msra.mxu0 0
  %42 = vmatpush.bf16.msra.mxu0 0
  %43 = vmatpush.bf16.msra.mxu0 0
  %44 = vmatpush.bf16.msra.mxu0 %v35
  %45 = vmatmul.bf16.gmra.mxu0 %v31
  %v46 = vpop.f32.mrf.mxu0
  %v47 = vadd.f32 0.0, %v46
  %v48 = vpop.f32.mrf.mxu0
  %49 = vdwg.mxu0
  %v51 = vsel %vm29, %v16, 0
  %53 = vmatpush.bf16.msra.mxu0 0
  %54 = vmatpush.bf16.msra.mxu0 0
  %55 = vmatpush.bf16.msra.mxu0 0
  %56 = vmatpush.bf16.msra.mxu0 0
  %57 = vmatpush.bf16.msra.mxu0 0
  %58 = vmatpush.bf16.msra.mxu0 0
  %59 = vmatpush.bf16.msra.mxu0 0
  %60 = vmatpush.bf16.msra.mxu0 %v35
  %61 = vmatmul.bf16.gmra.mxu0 %v51
  %v62 = vpop.f32.mrf.mxu0
  %v63 = vadd.f32 %v47, %v62
  %v64 = vpop.f32.mrf.mxu0
  %65 = vdwg.mxu0
  %v68 = vunpack.c.l.b16 %v22
  %v69 = vunpack.c.l.b16 %v23
  %v70 = vpack.c.b16 %v69, %v68
  %v72 = vsel %vm33, %v70, 0
  %74 = vmatpush.bf16.msra.mxu0 0
  %75 = vmatpush.bf16.msra.mxu0 0
  %76 = vmatpush.bf16.msra.mxu0 0
  %77 = vmatpush.bf16.msra.mxu0 0
  %78 = vmatpush.bf16.msra.mxu0 0
  %79 = vmatpush.bf16.msra.mxu0 0
  %80 = vmatpush.bf16.msra.mxu0 0
  %81 = vmatpush.bf16.msra.mxu0 %v72
  %82 = vmatmul.bf16.gmra.mxu0 %v51
  %v83 = vpop.f32.mrf.mxu0
  %v84 = vadd.f32 0.0, %v83
  %v85 = vpop.f32.mrf.mxu0
  %86 = vdwg.mxu0
  %v87 = vadd.f32 %v63, %v84
  %vm88 = vcmask 64512
  %89 = vst.msk [vmem:[%s3] sm:$0xff] %vm88, %v87
  // Predicated region
  $region14: #{second_order_all_pass_ifreqt.1} parent=0 // pred_check
    _
  $region15: #{second_order_all_pass_ifreqt.1} parent=0 // pred_check_branch
    %91 = sbr.rel (0) target = $region17
  $region16: #{second_order_all_pass_ifreqt.1} parent=0 // pred_region
    _
  $region17: #{second_order_all_pass_ifreqt.1} parent=0 // pred_fallthru
    _
  // Predicated region
  $region18: #{second_order_all_pass_ifreqt.1} parent=0 // pred_check
    _
  $region19: #{second_order_all_pass_ifreqt.1} parent=0 // pred_check_branch
    %93 = sbr.rel (0) target = $region21
  $region20: #{second_order_all_pass_ifreqt.1} parent=0 // pred_region
    _
  $region21: #{second_order_all_pass_ifreqt.1} parent=0 // pred_fallthru
    _

</llo_original>
